<compile_context>
chip_gen: v5e
topology: v5e:2x2
jax: 0.10.0
libtpu: 0.0.40
codegen_flags: <defaults>
</compile_context>

<pallas_src>
import functools

import jax
import jax.numpy as jnp
from jax.experimental import pallas as pl
from jax.experimental.pallas import tpu as pltpu


def _dense_ce_kernel(yp_ref, yt_ref, out_ref, *, batch_size, tile_b):
    i = pl.program_id(0)

    yp = yp_ref[...].astype(jnp.float32)  # (tile_b, C)
    yt = yt_ref[...].astype(jnp.float32)  # (tile_b, C)

    # numerically-stable log_softmax along the class (lane) axis
    m = jnp.max(yp, axis=-1, keepdims=True)
    shifted = yp - m
    lse = jnp.log(jnp.sum(jnp.exp(shifted), axis=-1, keepdims=True))
    logprobs = shifted - lse

    loss_elems = -yt * logprobs  # (tile_b, C)

    # mask rows past the logical batch end (handles the last, partial tile)
    row_ids = jax.lax.broadcasted_iota(jnp.int32, (tile_b, 1), 0)
    valid = row_ids < (batch_size - i * tile_b)
    loss_elems = jnp.where(valid, loss_elems, 0.0)

    # reduce over rows (sublanes) only -> lane-dense (1, C) partial per tile;
    # the cross-lane finish happens once, outside the kernel.
    partial = jnp.sum(loss_elems, axis=0, keepdims=True)
    out_ref[...] = partial.reshape(1, 1, -1)


def _pick_tile_b(B, C, itemsize_pred, itemsize_true, vmem_tile_budget_bytes):
    # minimum sublane tile: 8 for 32-bit dtypes, 16 for 16-bit (packed) dtypes
    sub = 16 if min(itemsize_pred, itemsize_true) == 2 else 8
    # 2 pipeline buffers per input (double buffering) -> bytes per batch row
    bytes_per_row = 2 * C * (itemsize_pred + itemsize_true)
    tile_b = vmem_tile_budget_bytes // max(bytes_per_row, 1)
    tile_b = min(tile_b, 1024)                   # diminishing returns beyond ~1k rows
    tile_b = min(tile_b, pl.cdiv(B, sub) * sub)  # don't exceed the (padded) batch
    tile_b = max(sub, (tile_b // sub) * sub)     # sublane-aligned
    return tile_b


def dense_cross_entropy(y_pred, y_true, *, vmem_tile_budget_bytes=24 * 1024 * 1024):
    """Pallas equivalent of DenseCrossEntropy.forward. Returns a float32 scalar."""
    B, C = y_pred.shape
    assert y_true.shape == (B, C)

    tile_b = _pick_tile_b(
        B, C,
        jnp.dtype(y_pred.dtype).itemsize,
        jnp.dtype(y_true.dtype).itemsize,
        vmem_tile_budget_bytes,
    )
    num_tiles = pl.cdiv(B, tile_b)

    partials = pl.pallas_call(
        functools.partial(_dense_ce_kernel, batch_size=B, tile_b=tile_b),
        out_shape=jax.ShapeDtypeStruct((num_tiles, 1, C), jnp.float32),
        grid_spec=pltpu.PrefetchScalarGridSpec(
            num_scalar_prefetch=0,
            grid=(num_tiles,),
            in_specs=[
                pl.BlockSpec((tile_b, C), lambda i: (i, 0)),
                pl.BlockSpec((tile_b, C), lambda i: (i, 0)),
            ],
            out_specs=pl.BlockSpec((1, 1, C), lambda i: (i, 0, 0)),
        ),
        compiler_params=pltpu.CompilerParams(
            dimension_semantics=("parallel",),     # tiles independent -> megacore OK
            vmem_limit_bytes=48 * 1024 * 1024,     # allow big double-buffered tiles
        ),
    )(y_pred, y_true)

    # Tiny final reduction of the per-tile lane partials (plain XLA).
    # TODO(synk): if targets are known one-hot, pass int labels (scalar prefetch)
    # instead of the dense y_true tensor to halve HBM traffic.
    return jnp.sum(partials)


if __name__ == "__main__":
    key = jax.random.PRNGKey(0)
    k1, k2 = jax.random.split(key)

    B, C = 16, 128  # small shapes; C=128 lane-aligned, B covered by one tile
    y_pred = jax.random.normal(k1, (B, C), dtype=jnp.float32)
    # dense (soft) targets, e.g. one-hot-ish / label-smoothed distribution
    labels = jax.random.randint(k2, (B,), 0, C)
    y_true = jax.nn.one_hot(labels, C, dtype=jnp.float32)

    loss = jax.block_until_ready(dense_cross_entropy(y_pred, y_true))

    # reference in plain JAX (matches the PyTorch module: sum, then .mean() of a scalar)
    ref = jnp.sum(-y_true * jax.nn.log_softmax(y_pred, axis=-1))
    assert jnp.allclose(loss, ref, rtol=1e-5, atol=1e-5), (loss, ref)

    print("KERNEL_OK")
</pallas_src>

<mosaic_0001>
module attributes {stable_mosaic.version = 11 : i64} {
  func.func @_dense_ce_kernel(%arg0: i32, %arg1: memref<16x128xf32, #tpu.memory_space<vmem>>, %arg2: memref<16x128xf32, #tpu.memory_space<vmem>>, %arg3: memref<1x1x128xf32, #tpu.memory_space<vmem>>) attributes {dimension_semantics = [#tpu.dimension_semantics<parallel>], iteration_bounds = array<i64: 1>, scalar_prefetch = 0 : i64, scratch_operands = 0 : i64, tpu.core_type = #tpu.core_type<tc>, window_params = [{transform_indices = @transform_0, window_bounds = array<i64: 16, 128>}, {transform_indices = @transform_1, window_bounds = array<i64: 16, 128>}, {transform_indices = @transform_2, window_bounds = array<i64: 1, 1, 128>}]} {
    %c0 = arith.constant 0 : index
    %c0_0 = arith.constant 0 : index
    %0 = vector.load %arg1[%c0, %c0_0] : memref<16x128xf32, #tpu.memory_space<vmem>>, vector<16x128xf32>
    %c0_1 = arith.constant 0 : index
    %c0_2 = arith.constant 0 : index
    %1 = vector.load %arg2[%c0_1, %c0_2] : memref<16x128xf32, #tpu.memory_space<vmem>>, vector<16x128xf32>
    %cst = arith.constant dense<0xFF800000> : vector<16xf32>
    %2 = vector.multi_reduction <maximumf>, %0, %cst [1] : vector<16x128xf32> to vector<16xf32>
    %3 = vector.shape_cast %2 : vector<16xf32> to vector<16x1xf32>
    %4 = vector.broadcast %3 : vector<16x1xf32> to vector<16x128xf32>
    %5 = arith.subf %0, %4 : vector<16x128xf32>
    %6 = math.exp %5 : vector<16x128xf32>
    %cst_3 = arith.constant dense<0.000000e+00> : vector<16xf32>
    %7 = vector.multi_reduction <add>, %6, %cst_3 [1] : vector<16x128xf32> to vector<16xf32>
    %8 = vector.shape_cast %7 : vector<16xf32> to vector<16x1xf32>
    %9 = math.log %8 : vector<16x1xf32>
    %10 = vector.broadcast %9 : vector<16x1xf32> to vector<16x128xf32>
    %11 = arith.subf %5, %10 : vector<16x128xf32>
    %cst_4 = arith.constant 0.000000e+00 : f32
    %12 = vector.broadcast %cst_4 : f32 to vector<16x128xf32>
    %13 = arith.subf %12, %1 : vector<16x128xf32>
    %14 = arith.mulf %13, %11 : vector<16x128xf32>
    %15 = tpu.iota {dimensions = array<i32: 0>} : vector<16x1xi32>
    %c16_i32 = arith.constant 16 : i32
    %16 = arith.muli %arg0, %c16_i32 : i32
    %c16_i32_5 = arith.constant 16 : i32
    %17 = arith.subi %c16_i32_5, %16 : i32
    %18 = vector.broadcast %17 : i32 to vector<16x1xi32>
    %19 = arith.cmpi slt, %15, %18 : vector<16x1xi32>
    %cst_6 = arith.constant 0.000000e+00 : f32
    %20 = vector.shape_cast %19 : vector<16x1xi1> to vector<16x1xi1>
    %21 = vector.broadcast %20 : vector<16x1xi1> to vector<16x128xi1>
    %22 = vector.broadcast %cst_6 : f32 to vector<16x128xf32>
    %23 = arith.select %21, %14, %22 : vector<16x128xi1>, vector<16x128xf32>
    %cst_7 = arith.constant dense<0.000000e+00> : vector<128xf32>
    %24 = vector.multi_reduction <add>, %23, %cst_7 [0] : vector<16x128xf32> to vector<128xf32>
    %25 = vector.shape_cast %24 : vector<128xf32> to vector<1x128xf32>
    %26 = vector.shape_cast %25 : vector<1x128xf32> to vector<1x1x128xf32>
    %c0_8 = arith.constant 0 : index
    %c0_9 = arith.constant 0 : index
    %c0_10 = arith.constant 0 : index
    %27 = vector.load %arg3[%c0_8, %c0_9, %c0_10] : memref<1x1x128xf32, #tpu.memory_space<vmem>>, vector<1x1x128xf32>
    tpu.vector_store %arg3[%c0_8, %c0_9, %c0_10], %26 {strides = array<i32>} : memref<1x1x128xf32, #tpu.memory_space<vmem>>, vector<1x1x128xf32>,
    return
  }
  func.func @transform_0(%arg0: i32) -> (i32, i32) {
    %c0_i32 = arith.constant 0 : i32
    %c0_i32_0 = arith.constant 0 : i32
    return %arg0, %c0_i32 : i32, i32
  }
  func.func @transform_1(%arg0: i32) -> (i32, i32) {
    %c0_i32 = arith.constant 0 : i32
    %c0_i32_0 = arith.constant 0 : i32
    return %arg0, %c0_i32 : i32, i32
  }
  func.func @transform_2(%arg0: i32) -> (i32, i32, i32) {
    %c0_i32 = arith.constant 0 : i32
    %c0_i32_0 = arith.constant 0 : i32
    %c0_i32_1 = arith.constant 0 : i32
    return %arg0, %c0_i32, %c0_i32_0 : i32, i32, i32
  }
}

</mosaic_0001>

<llo_original>
// kernel: tpu_custom_call.1
$region0: #{tpu_custom_call.1}
  #allocation0 [shape = 'u32[]', space=smem, size = 0x4, offset = 0x4, fixed_abs, tag = 'smem constant byte address 0x4 - core index']
  #allocation1 [shape = 'u32[72,128]{1,0:T(1,128)}', space=vmem, size = 0x9000, scoped, tag = 'internal scratch']
  %s0 = inlined_call_operand.hbm [shape: f32[16,128], index: 0, kind: input, shape index: {}]
  %s1 = inlined_call_operand.hbm [shape: f32[16,128], index: 1, kind: input, shape index: {}]
  %s2 = inlined_call_operand.hbm [shape: f32[1,1,128], index: 2, kind: output, shape index: {}]
  %s3 = sld [smem:[#allocation0]]
  $region26: #{tpu_custom_call.1} parent=0
    _
  %s5 = ssub.s32 1, %s3
  %s6 = scalar_select 0, %s5, %s3
  $region1: #{tpu_custom_call.1} parent=0
    #allocation2 [shape = 'u8[8192]{0}', space=vmem, size = 0x2000, scoped, tag = 'input window, operand 0, single buffered']
    #allocation3 [shape = 's32[1]{0}', space=sflag, size = 0x4, scoped, tag = 'scoped memory for tpu_custom_call.1']
    #allocation4 [shape = 's32[1]{0}', space=sflag, size = 0x4, scoped, tag = 'scoped memory for tpu_custom_call.1']
    #allocation5 [shape = 'u8[8192]{0}', space=vmem, size = 0x2000, scoped, tag = 'input window, operand 1, single buffered']
    #allocation6 [shape = 's32[1]{0}', space=sflag, size = 0x4, scoped, tag = 'scoped memory for tpu_custom_call.1']
    #allocation7 [shape = 'u8[512]{0}', space=vmem, size = 0x400, scoped, tag = 'output window, operand 0, single buffered']
    %7 = vsyncpa [#allocation3], 0
    %8 = vsyncpa [#allocation6], 0
    %9 = vsyncpa [#allocation4], 0
    // Predicated region
    $region2: #{tpu_custom_call.1} parent=1 // pred_check
      _
    $region3: #{tpu_custom_call.1} parent=1 // pred_check_branch
      %11 = sbr.rel (0) target = $region5
    $region4: #{tpu_custom_call.1} parent=1 // pred_region
      %13 = vsyncadd [#allocation3], 0
      %s14 = sshll.u32 %s0, 4
      %s15 = int_to_ptr.hbm [resolvable:$true] %s14
      %s16 = sshll.u32 [#allocation2], 4
      %s17 = int_to_ptr.vmem [resolvable:$true] %s16
      %22 = dma.hbm_to_vmem [thread:$0]  %s15, 256, %s17, [#allocation3], 128, 128, 8
    $region5: #{tpu_custom_call.1} parent=1 // pred_fallthru
      _
    // Predicated region
    $region6: #{tpu_custom_call.1} parent=1 // pred_check
      _
    $region7: #{tpu_custom_call.1} parent=1 // pred_check_branch
      %24 = sbr.rel (0) target = $region9
    $region8: #{tpu_custom_call.1} parent=1 // pred_region
      %26 = vsyncadd [#allocation6], 0
      %s27 = sshll.u32 %s1, 4
      %s28 = int_to_ptr.hbm [resolvable:$true] %s27
      %s29 = sshll.u32 [#allocation5], 4
      %s30 = int_to_ptr.vmem [resolvable:$true] %s29
      %35 = dma.hbm_to_vmem [thread:$0]  %s28, 256, %s30, [#allocation6], 128, 128, 8
    $region9: #{tpu_custom_call.1} parent=1 // pred_fallthru
      _
    // Predicated region
    $region10: #{tpu_custom_call.1} parent=1 // pred_check
      _
    $region11: #{tpu_custom_call.1} parent=1 // pred_check_branch
      %37 = sbr.rel (0) target = $region13
    $region12: #{tpu_custom_call.1} parent=1 // pred_region
      %39 = dma.done [#allocation3], 256
    $region13: #{tpu_custom_call.1} parent=1 // pred_fallthru
      _
    // Predicated region
    $region14: #{tpu_custom_call.1} parent=1 // pred_check
      _
    $region15: #{tpu_custom_call.1} parent=1 // pred_check_branch
      %41 = sbr.rel (0) target = $region17
    $region16: #{tpu_custom_call.1} parent=1 // pred_region
      %43 = dma.done [#allocation6], 256
    $region17: #{tpu_custom_call.1} parent=1 // pred_fallthru
      _
    %v44 = vld [vmem:[#allocation2] sm:$0xff]
    %v45 = vld [vmem:[#allocation2 + $0x8] sm:$0xff]
    %v46 = vld [vmem:[#allocation5] sm:$0xff]
    %v47 = vld [vmem:[#allocation5 + $0x8] sm:$0xff]
    %48 = vmax.xlane.f32.xlu0 %v44
    %v49 = vpop.xlane.xlu0 %48
    %50 = vmax.xlane.f32.xlu0 %v45
    %v51 = vpop.xlane.xlu0 %50
    %v52 = vsub.f32 %v44, %v49
    %v53 = vsub.f32 %v45, %v51
    %v54 = vmul.f32 %v52, 1.442695
    %v55 = vpow.pop %v54
    %v56 = vmul.f32 %v53, 1.442695
    %v57 = vpow.pop %v56
    %58 = vadd.xlane.f32.xlu0 %v55
    %v59 = vpop.xlane.xlu0 %58
    %60 = vadd.xlane.f32.xlu0 %v57
    %v61 = vpop.xlane.xlu0 %60
    %v62 = vlog2.pop %v59
    %v63 = vmul.f32 %v62, 0.6931472
    %v64 = vlog2.pop %v61
    %v65 = vmul.f32 %v64, 0.6931472
    %v66 = vsub.f32 %v52, %v63
    %v67 = vsub.f32 %v53, %v65
    %v68 = vsub.f32 0.0, %v46
    %v69 = vsub.f32 0.0, %v47
    %v70 = vmul.f32 %v68, %v66
    %v71 = vmul.f32 %v69, %v67
    %v72 = vlaneseq
    %v73 = vshrl.u32 %v72, 7
    %v74 = vadd.s32 %v73, 8
    %s75 = smul.u32 0, 16
    %s76 = ssub.s32 16, %s75
    %v77 = vstv %s76
    %vm78 = vcmp.lt.s32.totalorder %v73, %v77
    %vm79 = vcmp.lt.s32.totalorder %v74, %v77
    %v80 = vsel %vm78, 1, 0
    %v81 = vsel %vm79, 1, 0
    %vm82 = vcmp.eq.s32.totalorder %v80, 1
    %vm83 = vcmp.eq.s32.totalorder %v81, 1
    %v84 = vsel %vm82, %v70, 0.0
    %v85 = vsel %vm83, %v71, 0.0
    %v86 = vadd.f32 %v84, %v85
    %v87 = vrot.slane %v86, 4
    %v88 = vadd.f32 %v86, %v87
    %v89 = vrot.slane %v88, 2
    %v90 = vadd.f32 %v88, %v89
    %v91 = vrot.slane %v90, 1
    %v92 = vadd.f32 %v90, %v91
    %93 = vst [vmem:[#allocation7] sm:$0x1] %v92
    // Predicated region
    $region18: #{tpu_custom_call.1} parent=1 // pred_check
      _
    $region19: #{tpu_custom_call.1} parent=1 // pred_check_branch
      %95 = sbr.rel (0) target = $region21
    $region20: #{tpu_custom_call.1} parent=1 // pred_region
      %97 = vsyncadd [#allocation4], 0
      %s99 = sshll.u32 [#allocation7], 4
      %s100 = int_to_ptr.vmem [resolvable:$true] %s99
      %s101 = sshll.u32 %s2, 4
      %s102 = int_to_ptr.hbm [resolvable:$true] %s101
      %104 = dma.vmem_to_hbm [thread:$0]  %s100, 16, %s102, [#allocation4]
    $region21: #{tpu_custom_call.1} parent=1 // pred_fallthru
      _
    // Predicated region
    $region22: #{tpu_custom_call.1} parent=1 // pred_check
      _
    $region23: #{tpu_custom_call.1} parent=1 // pred_check_branch
      %106 = sbr.rel (0) target = $region25
    $region24: #{tpu_custom_call.1} parent=1 // pred_region
      %108 = dma.done [#allocation4], 16
    $region25: #{tpu_custom_call.1} parent=1 // pred_fallthru
      _
    %109 = vsyncpa [#allocation3], 1
    %110 = vsyncpa [#allocation6], 1
    %111 = vsyncpa [#allocation4], 1

</llo_original>
